<compile_context>
chip_gen: v5e
topology: v5e:2x2
jax: 0.10.0
libtpu: 0.0.40
codegen_flags: <defaults>
</compile_context>

<pallas_src>
import math

import jax
import jax.numpy as jnp
import numpy as np
from jax.experimental import pallas as pl
from jax.experimental.pallas import tpu as pltpu

D_SIZE = 32
N_HEADS = 4
HEAD_DIM = D_SIZE // N_HEADS
P_ATT = 0.1  # unused in eval-mode forward
F32_MIN = float(jnp.finfo(jnp.float32).min)


def mha_kernel(x_ref, w_ref, b_ref, o_ref):
    # x_ref: (block_b, S*D)   lane-dense, contiguous DMA
    # w_ref: (S*D, D)         W_big = tile(Wv@Wo, (S,1))  (VMEM-resident)
    # b_ref: (1, D)           b_comb = S*bv@Wo + bo
    # Single K=S*D MXU contraction; fuses the sum over the sequence axis,
    # the V projection and the output projection.
    y = jnp.dot(x_ref[...], w_ref[...],
                preferred_element_type=jnp.float32) + b_ref[...]
    o_ref[...] = y.astype(o_ref.dtype)


def multi_head_attention(x, params, *, block_b=None):
    B, S, D = x.shape
    # Q / K projections, mask and softmax are mathematically dead for this
    # module's literal forward (see header comment).
    _wq_t, _bq, _wk_t, _bk, wv_t, bv, wo_t, bo = params

    # --- wrapper-side param folding (one-time, tiny) ---
    w_comb = wv_t @ wo_t                      # (D, D)
    b_comb = S * (bv @ wo_t) + bo             # (1, D)
    w_big = jnp.tile(w_comb, (S, 1))          # (S*D, D): fuses sum over S into the matmul
    x_flat = x.reshape(B, S * D)              # lane-dense input view (free reshape)

    # --- grid heuristic: one fat step unless the batch is large ---
    if block_b is None:
        if B >= 16 and B % 16 == 0:
            block_b = B // 2                  # multiple of 8; 2 parallel steps for v7x
        else:
            block_b = B                       # single step: no per-step overhead
    assert B % block_b == 0
    n_steps = B // block_b
    semantics = ("parallel",) if n_steps > 1 else ("arbitrary",)

    y = pl.pallas_call(
        mha_kernel,
        out_shape=jax.ShapeDtypeStruct((B, D), x.dtype),
        grid=(n_steps,),
        in_specs=[
            pl.BlockSpec((block_b, S * D), lambda i: (i, 0)),   # x_flat
            pl.BlockSpec((S * D, D), lambda i: (0, 0)),         # W_big (resident)
            pl.BlockSpec((1, D), lambda i: (0, 0)),             # b_comb (resident)
        ],
        out_specs=pl.BlockSpec((block_b, D), lambda i: (i, 0)),
        compiler_params=pltpu.CompilerParams(dimension_semantics=semantics),
    )(x_flat, w_big, b_comb)

    # Every query position gets the same row; broadcast outside the kernel so
    # kernel writeback is S times smaller and XLA can fuse it with consumers.
    return jnp.broadcast_to(y[:, None, :], (B, S, D))


def ref_forward(x, params):
    """Pure-JAX reference mirroring the PyTorch forward exactly (literal formula)."""
    wq_t, bq, wk_t, bk, wv_t, bv, wo_t, bo = params
    B, S, D = x.shape
    q = (x @ wq_t + bq).reshape(B, S, N_HEADS, HEAD_DIM)
    k = (x @ wk_t + bk).reshape(B, S, N_HEADS, HEAD_DIM)
    v = (x @ wv_t + bv).reshape(B, S, N_HEADS, HEAD_DIM)
    qk = jnp.einsum('bqhd,bkhd->bhqk', q, k) / math.sqrt(D)
    mask = jnp.triu(jnp.ones((S, S)))[None, None]
    qk = jnp.where(mask == 0, F32_MIN, qk)
    scores = jax.nn.softmax(qk, axis=3)
    out = jnp.einsum('bhqk,bvhd->bqhd', scores, v)   # k and v summed separately
    concat = out.reshape(B, S, D)
    return concat @ wo_t + bo


def init_params(key, d_size):
    """Deterministic nn.Linear-style init: U(-1/sqrt(in), 1/sqrt(in))."""
    bound = 1.0 / math.sqrt(d_size)
    keys = jax.random.split(key, 8)
    params = []
    for i in range(4):  # Q, K, V, out
        w = jax.random.uniform(keys[2 * i], (d_size, d_size),
                               jnp.float32, -bound, bound)
        b = jax.random.uniform(keys[2 * i + 1], (1, d_size),
                               jnp.float32, -bound, bound)
        params += [w.T, b]  # store pre-transposed weight (in, out)
    return tuple(params)


if __name__ == "__main__":
    B, S = 2, 8
    key = jax.random.PRNGKey(0)
    kx, kp = jax.random.split(key)
    x = jax.random.normal(kx, (B, S, D_SIZE), dtype=jnp.float32)
    params = init_params(kp, D_SIZE)

    out = jax.block_until_ready(multi_head_attention(x, params))
    ref = jax.block_until_ready(ref_forward(x, params))

    np.testing.assert_allclose(np.asarray(out), np.asarray(ref),
                               rtol=1e-5, atol=1e-5)
    print("KERNEL_OK")
</pallas_src>

<mosaic_0001>
module attributes {stable_mosaic.version = 11 : i64} {
  func.func @mha_kernel(%arg0: i32, %arg1: memref<2x256xf32, #tpu.memory_space<vmem>>, %arg2: memref<256x32xf32, #tpu.memory_space<vmem>>, %arg3: memref<1x32xf32, #tpu.memory_space<vmem>>, %arg4: memref<2x32xf32, #tpu.memory_space<vmem>>) attributes {dimension_semantics = [#tpu.dimension_semantics<arbitrary>], iteration_bounds = array<i64: 1>, scalar_prefetch = 0 : i64, scratch_operands = 0 : i64, tpu.core_type = #tpu.core_type<tc>, window_params = [{transform_indices = @transform_0, window_bounds = array<i64: 2, 256>}, {pipeline_mode = #tpu.pipeline_mode<synchronous>, transform_indices = @transform_1, window_bounds = array<i64: 256, 32>}, {pipeline_mode = #tpu.pipeline_mode<synchronous>, transform_indices = @transform_2, window_bounds = array<i64: 1, 32>}, {transform_indices = @transform_3, window_bounds = array<i64: 2, 32>}]} {
    %c0 = arith.constant 0 : index
    %c0_0 = arith.constant 0 : index
    %0 = vector.load %arg1[%c0, %c0_0] : memref<2x256xf32, #tpu.memory_space<vmem>>, vector<2x256xf32>
    %c0_1 = arith.constant 0 : index
    %c0_2 = arith.constant 0 : index
    %1 = vector.load %arg2[%c0_1, %c0_2] : memref<256x32xf32, #tpu.memory_space<vmem>>, vector<256x32xf32>
    %cst = arith.constant dense<0.000000e+00> : vector<2x32xf32>
    %2 = tpu.matmul %0, %1, %cst {dimension_numbers = #tpu.dot_dimension_numbers<[1], [0], [0], [1], [0, 0, 1, 1], [], []>} : vector<2x256xf32>, vector<256x32xf32>, vector<2x32xf32> -> vector<2x32xf32>
    %c0_3 = arith.constant 0 : index
    %c0_4 = arith.constant 0 : index
    %3 = vector.load %arg3[%c0_3, %c0_4] : memref<1x32xf32, #tpu.memory_space<vmem>>, vector<1x32xf32>
    %4 = vector.broadcast %3 : vector<1x32xf32> to vector<2x32xf32>
    %5 = arith.addf %2, %4 : vector<2x32xf32>
    %c0_5 = arith.constant 0 : index
    %c0_6 = arith.constant 0 : index
    %6 = vector.load %arg4[%c0_5, %c0_6] : memref<2x32xf32, #tpu.memory_space<vmem>>, vector<2x32xf32>
    tpu.vector_store %arg4[%c0_5, %c0_6], %5 {strides = array<i32>} : memref<2x32xf32, #tpu.memory_space<vmem>>, vector<2x32xf32>,
    return
  }
  func.func @transform_0(%arg0: i32) -> (i32, i32) {
    %c0_i32 = arith.constant 0 : i32
    %c0_i32_0 = arith.constant 0 : i32
    return %arg0, %c0_i32 : i32, i32
  }
  func.func @transform_1(%arg0: i32) -> (i32, i32) {
    %c0_i32 = arith.constant 0 : i32
    %c0_i32_0 = arith.constant 0 : i32
    %c0_i32_1 = arith.constant 0 : i32
    return %c0_i32, %c0_i32_0 : i32, i32
  }
  func.func @transform_2(%arg0: i32) -> (i32, i32) {
    %c0_i32 = arith.constant 0 : i32
    %c0_i32_0 = arith.constant 0 : i32
    %c0_i32_1 = arith.constant 0 : i32
    return %c0_i32, %c0_i32_0 : i32, i32
  }
  func.func @transform_3(%arg0: i32) -> (i32, i32) {
    %c0_i32 = arith.constant 0 : i32
    %c0_i32_0 = arith.constant 0 : i32
    return %arg0, %c0_i32 : i32, i32
  }
}

</mosaic_0001>

<llo_original>
// kernel: tpu_custom_call.1
$region0: #{tpu_custom_call.1}
  #allocation0 [shape = 'u32[]', space=smem, size = 0x4, offset = 0x4, fixed_abs, tag = 'smem constant byte address 0x4 - core index']
  #allocation1 [shape = 'u32[72,128]{1,0:T(1,128)}', space=vmem, size = 0x9000, scoped, tag = 'internal scratch']
  %s0 = inlined_call_operand.vmem [shape: f32[2,256], index: 0, kind: input, shape index: {}]
  %s1 = inlined_call_operand.vmem [shape: f32[256,32], index: 1, kind: input, shape index: {}]
  %s2 = inlined_call_operand.vmem [shape: f32[1,32], index: 2, kind: input, shape index: {}]
  %s3 = inlined_call_operand.hbm [shape: f32[2,32], index: 3, kind: output, shape index: {}]
  %s4 = sld [smem:[#allocation0]]
  $region22: #{tpu_custom_call.1} parent=0
    _
  %s6 = ssub.s32 1, %s4
  %s7 = scalar_select 0, %s6, %s4
  $region1: #{tpu_custom_call.1} parent=0
    #allocation2 [shape = 'u8[1024]{0}', space=vmem, size = 0x400, scoped, tag = 'output window, operand 0, single buffered']
    #allocation3 [shape = 's32[1]{0}', space=sflag, size = 0x4, scoped, tag = 'scoped memory for tpu_custom_call.1']
    %8 = vsyncpa [#allocation3], 0
    // Predicated region
    $region2: #{tpu_custom_call.1} parent=1 // pred_check
      _
    $region3: #{tpu_custom_call.1} parent=1 // pred_check_branch
      %10 = sbr.rel (0) target = $region5
    $region4: #{tpu_custom_call.1} parent=1 // pred_region
      _
    $region5: #{tpu_custom_call.1} parent=1 // pred_fallthru
      _
    // Predicated region
    $region6: #{tpu_custom_call.1} parent=1 // pred_check
      _
    $region7: #{tpu_custom_call.1} parent=1 // pred_check_branch
      %12 = sbr.rel (0) target = $region9
    $region8: #{tpu_custom_call.1} parent=1 // pred_region
      _
    $region9: #{tpu_custom_call.1} parent=1 // pred_fallthru
      _
    // Predicated region
    $region10: #{tpu_custom_call.1} parent=1 // pred_check
      _
    $region11: #{tpu_custom_call.1} parent=1 // pred_check_branch
      %14 = sbr.rel (0) target = $region13
    $region12: #{tpu_custom_call.1} parent=1 // pred_region
      _
    $region13: #{tpu_custom_call.1} parent=1 // pred_fallthru
      _
    %v15 = vld [vmem:[%s0] sm:$0xf]
    %v16 = vld [vmem:[%s1] sm:$0xff]
    %v17 = vld [vmem:[%s1 + $0x8] sm:$0xff]
    %v18 = vld [vmem:[%s1 + $0x10] sm:$0xff]
    %v19 = vld [vmem:[%s1 + $0x18] sm:$0xff]
    %v20 = vld [vmem:[%s1 + $0x20] sm:$0xff]
    %v21 = vld [vmem:[%s1 + $0x28] sm:$0xff]
    %v22 = vld [vmem:[%s1 + $0x30] sm:$0xff]
    %v23 = vld [vmem:[%s1 + $0x38] sm:$0xff]
    %v24 = vld [vmem:[%s1 + $0x40] sm:$0xff]
    %v25 = vld [vmem:[%s1 + $0x48] sm:$0xff]
    %v26 = vld [vmem:[%s1 + $0x50] sm:$0xff]
    %v27 = vld [vmem:[%s1 + $0x58] sm:$0xff]
    %v28 = vld [vmem:[%s1 + $0x60] sm:$0xff]
    %v29 = vld [vmem:[%s1 + $0x68] sm:$0xff]
    %v30 = vld [vmem:[%s1 + $0x70] sm:$0xff]
    %v31 = vld [vmem:[%s1 + $0x78] sm:$0xff]
    %v32 = vld [vmem:[%s1 + $0x80] sm:$0xff]
    %v33 = vld [vmem:[%s1 + $0x88] sm:$0xff]
    %v34 = vld [vmem:[%s1 + $0x90] sm:$0xff]
    %v35 = vld [vmem:[%s1 + $0x98] sm:$0xff]
    %v36 = vld [vmem:[%s1 + $0xa0] sm:$0xff]
    %v37 = vld [vmem:[%s1 + $0xa8] sm:$0xff]
    %v38 = vld [vmem:[%s1 + $0xb0] sm:$0xff]
    %v39 = vld [vmem:[%s1 + $0xb8] sm:$0xff]
    %v40 = vld [vmem:[%s1 + $0xc0] sm:$0xff]
    %v41 = vld [vmem:[%s1 + $0xc8] sm:$0xff]
    %v42 = vld [vmem:[%s1 + $0xd0] sm:$0xff]
    %v43 = vld [vmem:[%s1 + $0xd8] sm:$0xff]
    %v44 = vld [vmem:[%s1 + $0xe0] sm:$0xff]
    %v45 = vld [vmem:[%s1 + $0xe8] sm:$0xff]
    %v46 = vld [vmem:[%s1 + $0xf0] sm:$0xff]
    %v47 = vld [vmem:[%s1 + $0xf8] sm:$0xff]
    %v48 = vld [vmem:[%s2] sm:$0x1]
    %v50 = vperm.slane %v48, 0
    %53 = vst [vmem:[#allocation1] ss:$4 sm:$0xff] %v15
    %v54 = vld.sshfl [vmem:[#allocation1] sm:$0xff pattern:$0x73625140]
    %v55 = vld.sshfl [vmem:[#allocation1 + $0x8] sm:$0xff pattern:$0x73625140]
    %58 = vmatpush.msra.mxu0 %v31
    %59 = vmatpush.msra.mxu0 %v30
    %60 = vmatpush.msra.mxu0 %v29
    %61 = vmatpush.msra.mxu0 %v28
    %62 = vmatpush.msra.mxu0 %v27
    %63 = vmatpush.msra.mxu0 %v26
    %64 = vmatpush.msra.mxu0 %v25
    %65 = vmatpush.msra.mxu0 %v24
    %66 = vmatpush.msra.mxu0 %v23
    %67 = vmatpush.msra.mxu0 %v22
    %68 = vmatpush.msra.mxu0 %v21
    %69 = vmatpush.msra.mxu0 %v20
    %70 = vmatpush.msra.mxu0 %v19
    %71 = vmatpush.msra.mxu0 %v18
    %72 = vmatpush.msra.mxu0 %v17
    %73 = vmatpush.msra.mxu0 %v16
    %74 = vmatmul.f32.gmra.mxu0 %v54
    %v75 = vpop.f32.mrf.mxu0
    %v76 = vadd.f32 %v50, %v75
    %77 = vdwg.mxu0
    %78 = vmatpush.msra.mxu0 %v47
    %79 = vmatpush.msra.mxu0 %v46
    %80 = vmatpush.msra.mxu0 %v45
    %81 = vmatpush.msra.mxu0 %v44
    %82 = vmatpush.msra.mxu0 %v43
    %83 = vmatpush.msra.mxu0 %v42
    %84 = vmatpush.msra.mxu0 %v41
    %85 = vmatpush.msra.mxu0 %v40
    %86 = vmatpush.msra.mxu0 %v39
    %87 = vmatpush.msra.mxu0 %v38
    %88 = vmatpush.msra.mxu0 %v37
    %89 = vmatpush.msra.mxu0 %v36
    %90 = vmatpush.msra.mxu0 %v35
    %91 = vmatpush.msra.mxu0 %v34
    %92 = vmatpush.msra.mxu0 %v33
    %93 = vmatpush.msra.mxu0 %v32
    %94 = vmatmul.f32.gmra.mxu0 %v55
    %v95 = vpop.f32.mrf.mxu0
    %v96 = vadd.f32 %v76, %v95
    %97 = vdwg.mxu0
    %vm98 = vcmask 254976
    %99 = vst.msk [vmem:[#allocation2] sm:$0x3] %vm98, %v96
    // Predicated region
    $region14: #{tpu_custom_call.1} parent=1 // pred_check
      _
    $region15: #{tpu_custom_call.1} parent=1 // pred_check_branch
      %101 = sbr.rel (0) target = $region17
    $region16: #{tpu_custom_call.1} parent=1 // pred_region
      %103 = vsyncadd [#allocation3], 0
      %s105 = sshll.u32 [#allocation2], 4
      %s106 = int_to_ptr.vmem [resolvable:$true] %s105
      %s107 = sshll.u32 %s3, 4
      %s108 = int_to_ptr.hbm [resolvable:$true] %s107
      %110 = dma.vmem_to_hbm [thread:$0]  %s106, 32, %s108, [#allocation3]
    $region17: #{tpu_custom_call.1} parent=1 // pred_fallthru
      _
    // Predicated region
    $region18: #{tpu_custom_call.1} parent=1 // pred_check
      _
    $region19: #{tpu_custom_call.1} parent=1 // pred_check_branch
      %112 = sbr.rel (0) target = $region21
    $region20: #{tpu_custom_call.1} parent=1 // pred_region
      %114 = dma.done [#allocation3], 32
    $region21: #{tpu_custom_call.1} parent=1 // pred_fallthru
      _
    %115 = vsyncpa [#allocation3], 1

</llo_original>
